<compile_context>
chip_gen: v7x
topology: tpu7x:2x2x1
jax: 0.10.0
libtpu: 0.0.40
codegen_flags: <defaults>
</compile_context>

<pallas_src>
import functools

import jax
import jax.numpy as jnp
from jax import lax
from jax.experimental import pallas as pl
from jax.experimental.pallas import tpu as pltpu


def _round_up(a, b):
    return (a + b - 1) // b * b


def _triplet_tile_kernel(margin, gram_dtype,
                         n_ref,            # scalar-prefetch: (1,) int32, true batch size
                         xq_ref,           # (TILE_M, d_pad) f32, L2-normalized anchor rows
                         xk_ref,           # (n_pad, d_pad) f32, L2-normalized all rows (resident)
                         sqrow_ref,        # (1, n_pad) f32, squared norms of normalized rows
                         tcol_ref,         # (TILE_M, 1) int32 labels (anchor tile)
                         trow_ref,         # (1, n_pad) int32 labels (all)
                         loss_ref,         # (TILE_M, 1) f32 per-anchor loss
                         corr_ref):        # (TILE_M, 1) f32 per-anchor "correct" flag
    xq = xq_ref[...]
    xk = xk_ref[...]
    sq_row = sqrow_ref[...]
    t_col = tcol_ref[...]
    t_row = trow_ref[...]
    n_valid = n_ref[0]
    n_pad = xk.shape[0]

    # Anchor-side squared norms: cheap lane reduction (no extra matmul).
    sq_col = jnp.sum(xq * xq, axis=1, keepdims=True)                 # (TILE_M, 1)

    # Gram on the MXU (bf16 inputs by default, f32 accumulation).
    gram = lax.dot_general(xq.astype(gram_dtype), xk.astype(gram_dtype),
                           (((1,), (1,)), ((), ())),
                           preferred_element_type=jnp.float32)       # (TILE_M, n_pad)

    # Squared pairwise distances (mining happens on these; sqrt deferred).
    d2 = sq_col + sq_row - 2.0 * gram                                # (TILE_M, n_pad)

    # Validity of columns (padded columns excluded from both pos and neg sets).
    col_idx = lax.broadcasted_iota(jnp.int32, (1, n_pad), 1)
    valid = col_idx < n_valid                                        # (1, n_pad)

    same = t_col == t_row                                            # (TILE_M, n_pad)
    big = jnp.float32(1e30)
    pos = jnp.where(jnp.logical_and(same, valid), d2, -big)
    neg = jnp.where(jnp.logical_or(same, jnp.logical_not(valid)), big, d2)

    d2_ap = jnp.max(pos, axis=1, keepdims=True)                      # (TILE_M, 1)
    d2_an = jnp.min(neg, axis=1, keepdims=True)                      # (TILE_M, 1)

    # clamp + sqrt only on the selected values (monotone -> commutes with max/min).
    dist_ap = jnp.sqrt(jnp.maximum(d2_ap, 1e-12))
    dist_an = jnp.sqrt(jnp.maximum(d2_an, 1e-12))

    z = dist_an - dist_ap
    if margin != 0:
        # nn.MarginRankingLoss(dist_an, dist_ap, y=1): max(0, margin - z)
        per_anchor = jnp.maximum(jnp.float32(margin) - z, 0.0)
    else:
        # nn.SoftMarginLoss(z, y=1): log(1 + exp(-z)), stable softplus form
        per_anchor = jnp.maximum(-z, 0.0) + jnp.log1p(jnp.exp(-jnp.abs(z)))

    loss_ref[...] = per_anchor
    # TODO(synk): `count_valid` is referenced but never defined in the source
    # module; we keep the open-reid convention: #anchors with dist_an > dist_ap.
    corr_ref[...] = (dist_an > dist_ap).astype(jnp.float32)


def triplet_loss(inputs, targets, *, margin=0.0, gram_dtype=jnp.bfloat16, tile_m=128):
    """inputs: (n, d) float; targets: (n,) int. Returns (loss, count) scalars."""
    n, d = inputs.shape
    x = inputs.astype(jnp.float32)

    # L2 row normalization (module's `normalize`), done once here so the gridded
    # kernel does not recompute it per anchor tile; also gives the (1, n) row of
    # squared norms without any in-kernel transpose / M=1 matmul.
    nrm = jnp.sqrt(jnp.sum(x * x, axis=1, keepdims=True))
    xn = x * (1.0 / (nrm + 1e-12))
    sq = jnp.sum(xn * xn, axis=1)                                    # (n,)

    # Pad to MXU/layout-friendly shapes.
    d_pad = _round_up(d, 128)
    tm = min(tile_m, _round_up(n, 8))
    n_pad = _round_up(n, tm)
    num_tiles = n_pad // tm

    xn_p = jnp.zeros((n_pad, d_pad), jnp.float32).at[:n, :d].set(xn)
    sq_row = jnp.zeros((1, n_pad), jnp.float32).at[0, :n].set(sq)
    t = targets.astype(jnp.int32)
    t_col = jnp.zeros((n_pad, 1), jnp.int32).at[:n, 0].set(t)
    t_row = jnp.zeros((1, n_pad), jnp.int32).at[0, :n].set(t)
    n_arr = jnp.array([n], jnp.int32)

    kernel = functools.partial(_triplet_tile_kernel, float(margin), gram_dtype)

    grid_spec = pltpu.PrefetchScalarGridSpec(
        num_scalar_prefetch=1,
        grid=(num_tiles,),
        in_specs=[
            pl.BlockSpec((tm, d_pad), lambda i, n_ref: (i, 0)),      # anchor tile
            pl.BlockSpec((n_pad, d_pad), lambda i, n_ref: (0, 0)),   # all rows (resident)
            pl.BlockSpec((1, n_pad), lambda i, n_ref: (0, 0)),       # squared norms row
            pl.BlockSpec((tm, 1), lambda i, n_ref: (i, 0)),          # labels (anchor tile)
            pl.BlockSpec((1, n_pad), lambda i, n_ref: (0, 0)),       # labels row
        ],
        out_specs=[
            pl.BlockSpec((tm, 1), lambda i, n_ref: (i, 0)),
            pl.BlockSpec((tm, 1), lambda i, n_ref: (i, 0)),
        ],
    )

    loss_vec, corr_vec = pl.pallas_call(
        kernel,
        out_shape=(jax.ShapeDtypeStruct((n_pad, 1), jnp.float32),
                   jax.ShapeDtypeStruct((n_pad, 1), jnp.float32)),
        grid_spec=grid_spec,
        compiler_params=pltpu.CompilerParams(
            dimension_semantics=("parallel",),
            vmem_limit_bytes=48 * 1024 * 1024),
    )(n_arr, xn_p, xn_p, sq_row, t_col, t_row)

    # O(n) finalization (padded anchors sliced off here).
    loss = jnp.sum(loss_vec[:n, 0]) / jnp.float32(n)
    count = jnp.sum(corr_vec[:n, 0])
    return loss, count


def _reference(inputs, targets, margin=0.0):
    """Pure-JAX reference mirroring the PyTorch forward."""
    x = inputs / (jnp.linalg.norm(inputs, axis=1, keepdims=True) + 1e-12)
    sq = jnp.sum(x * x, axis=1, keepdims=True)
    dist = sq + sq.T - 2.0 * (x @ x.T)
    dist = jnp.sqrt(jnp.clip(dist, 1e-12, None))
    mask = targets[:, None] == targets[None, :]
    dist_ap = jnp.max(jnp.where(mask, dist, -1e30), axis=1)
    dist_an = jnp.min(jnp.where(mask, 1e30, dist), axis=1)
    z = dist_an - dist_ap
    if margin != 0:
        loss = jnp.mean(jnp.maximum(margin - z, 0.0))
    else:
        loss = jnp.mean(jnp.log1p(jnp.exp(-z)))
    count = jnp.sum((dist_an > dist_ap).astype(jnp.float32))
    return loss, count


if __name__ == "__main__":
    key = jax.random.PRNGKey(0)
    n, d = 8, 32
    x = jax.random.normal(key, (n, d), dtype=jnp.float32)
    targets = jnp.array([0, 0, 1, 1, 2, 2, 3, 3], dtype=jnp.int32)

    ref_loss, ref_count = _reference(x, targets)

    # Exact-precision path (f32 gram) — tight check against the reference.
    loss_f32, count_f32 = triplet_loss(x, targets, gram_dtype=jnp.float32)
    jax.block_until_ready((loss_f32, count_f32))
    assert jnp.allclose(loss_f32, ref_loss, rtol=1e-4, atol=1e-4), (loss_f32, ref_loss)
    assert jnp.allclose(count_f32, ref_count), (count_f32, ref_count)

    # Fast path (bf16 gram, f32 accumulation) — loose check (bf16 shifts ~1e-3).
    loss_bf16, count_bf16 = triplet_loss(x, targets)
    jax.block_until_ready((loss_bf16, count_bf16))
    assert jnp.abs(loss_bf16 - ref_loss) < 3e-2, (loss_bf16, ref_loss)

    print("KERNEL_OK")
</pallas_src>

<mosaic_0001>
module attributes {stable_mosaic.version = 11 : i64} {
  func.func @_triplet_tile_kernel(%arg0: i32, %arg1: memref<1xi32, #tpu.memory_space<smem>>, %arg2: memref<8x128xf32, #tpu.memory_space<vmem>>, %arg3: memref<8x128xf32, #tpu.memory_space<vmem>>, %arg4: memref<1x8xf32, #tpu.memory_space<vmem>>, %arg5: memref<8x1xi32, #tpu.memory_space<vmem>>, %arg6: memref<1x8xi32, #tpu.memory_space<vmem>>, %arg7: memref<8x1xf32, #tpu.memory_space<vmem>>, %arg8: memref<8x1xf32, #tpu.memory_space<vmem>>) attributes {dimension_semantics = [#tpu.dimension_semantics<parallel>], iteration_bounds = array<i64: 1>, scalar_prefetch = 1 : i64, scratch_operands = 0 : i64, tpu.core_type = #tpu.core_type<tc>, window_params = [{transform_indices = @transform_0, window_bounds = array<i64: 8, 128>}, {pipeline_mode = #tpu.pipeline_mode<synchronous>, transform_indices = @transform_1, window_bounds = array<i64: 8, 128>}, {pipeline_mode = #tpu.pipeline_mode<synchronous>, transform_indices = @transform_2, window_bounds = array<i64: 1, 8>}, {transform_indices = @transform_3, window_bounds = array<i64: 8, 1>}, {pipeline_mode = #tpu.pipeline_mode<synchronous>, transform_indices = @transform_4, window_bounds = array<i64: 1, 8>}, {transform_indices = @transform_5, window_bounds = array<i64: 8, 1>}, {transform_indices = @transform_6, window_bounds = array<i64: 8, 1>}]} {
    %c0 = arith.constant 0 : index
    %c0_0 = arith.constant 0 : index
    %0 = vector.load %arg2[%c0, %c0_0] : memref<8x128xf32, #tpu.memory_space<vmem>>, vector<8x128xf32>
    %c0_1 = arith.constant 0 : index
    %c0_2 = arith.constant 0 : index
    %1 = vector.load %arg3[%c0_1, %c0_2] : memref<8x128xf32, #tpu.memory_space<vmem>>, vector<8x128xf32>
    %c0_3 = arith.constant 0 : index
    %c0_4 = arith.constant 0 : index
    %2 = vector.load %arg4[%c0_3, %c0_4] : memref<1x8xf32, #tpu.memory_space<vmem>>, vector<1x8xf32>
    %c0_5 = arith.constant 0 : index
    %c0_6 = arith.constant 0 : index
    %3 = vector.load %arg5[%c0_5, %c0_6] : memref<8x1xi32, #tpu.memory_space<vmem>>, vector<8x1xi32>
    %c0_7 = arith.constant 0 : index
    %c0_8 = arith.constant 0 : index
    %4 = vector.load %arg6[%c0_7, %c0_8] : memref<1x8xi32, #tpu.memory_space<vmem>>, vector<1x8xi32>
    %c0_9 = arith.constant 0 : index
    %5 = memref.load %arg1[%c0_9] : memref<1xi32, #tpu.memory_space<smem>>
    %6 = arith.mulf %0, %0 : vector<8x128xf32>
    %cst = arith.constant dense<0.000000e+00> : vector<8xf32>
    %7 = vector.multi_reduction <add>, %6, %cst [1] : vector<8x128xf32> to vector<8xf32>
    %8 = vector.shape_cast %7 : vector<8xf32> to vector<8x1xf32>
    %cst_10 = arith.constant dense<0.000000e+00> : vector<8x8xf32>
    %9 = tpu.matmul %0, %1, %cst_10 {dimension_numbers = #tpu.dot_dimension_numbers<[1], [1], [0], [0], [0, 0, 1, 0], [], []>} : vector<8x128xf32>, vector<8x128xf32>, vector<8x8xf32> -> vector<8x8xf32>
    %10 = vector.broadcast %8 : vector<8x1xf32> to vector<8x8xf32>
    %11 = vector.broadcast %2 : vector<1x8xf32> to vector<8x8xf32>
    %12 = arith.addf %10, %11 : vector<8x8xf32>
    %cst_11 = arith.constant 2.000000e+00 : f32
    %13 = vector.broadcast %cst_11 : f32 to vector<8x8xf32>
    %14 = arith.mulf %13, %9 : vector<8x8xf32>
    %15 = arith.subf %12, %14 : vector<8x8xf32>
    %16 = tpu.iota {dimensions = array<i32: 1>} : vector<1x8xi32>
    %17 = vector.broadcast %5 : i32 to vector<1x8xi32>
    %18 = arith.cmpi slt, %16, %17 : vector<1x8xi32>
    %19 = vector.broadcast %3 : vector<8x1xi32> to vector<8x8xi32>
    %20 = vector.broadcast %4 : vector<1x8xi32> to vector<8x8xi32>
    %21 = arith.cmpi eq, %19, %20 : vector<8x8xi32>
    %22 = vector.broadcast %18 : vector<1x8xi1> to vector<8x8xi1>
    %23 = arith.andi %21, %22 : vector<8x8xi1>
    %cst_12 = arith.constant 0.000000e+00 : f32
    %cst_13 = arith.constant 1.000000e+30 : f32
    %24 = arith.subf %cst_12, %cst_13 : f32
    %25 = vector.broadcast %24 : f32 to vector<8x8xf32>
    %26 = arith.select %23, %15, %25 : vector<8x8xi1>, vector<8x8xf32>
    %cst_14 = arith.constant dense<true> : vector<1x8xi1>
    %27 = arith.xori %18, %cst_14 : vector<1x8xi1>
    %28 = vector.broadcast %27 : vector<1x8xi1> to vector<8x8xi1>
    %29 = arith.ori %21, %28 : vector<8x8xi1>
    %cst_15 = arith.constant 1.000000e+30 : f32
    %30 = vector.broadcast %cst_15 : f32 to vector<8x8xf32>
    %31 = arith.select %29, %30, %15 : vector<8x8xi1>, vector<8x8xf32>
    %cst_16 = arith.constant dense<0xFF800000> : vector<8xf32>
    %32 = vector.multi_reduction <maximumf>, %26, %cst_16 [1] : vector<8x8xf32> to vector<8xf32>
    %33 = vector.shape_cast %32 : vector<8xf32> to vector<8x1xf32>
    %cst_17 = arith.constant dense<0x7F800000> : vector<8xf32>
    %34 = vector.multi_reduction <minimumf>, %31, %cst_17 [1] : vector<8x8xf32> to vector<8xf32>
    %35 = vector.shape_cast %34 : vector<8xf32> to vector<8x1xf32>
    %cst_18 = arith.constant 9.99999996E-13 : f32
    %36 = vector.broadcast %cst_18 : f32 to vector<8x1xf32>
    %37 = arith.maximumf %33, %36 : vector<8x1xf32>
    %38 = math.sqrt %37 : vector<8x1xf32>
    %cst_19 = arith.constant 9.99999996E-13 : f32
    %39 = vector.broadcast %cst_19 : f32 to vector<8x1xf32>
    %40 = arith.maximumf %35, %39 : vector<8x1xf32>
    %41 = math.sqrt %40 : vector<8x1xf32>
    %42 = arith.subf %41, %38 : vector<8x1xf32>
    %cst_20 = arith.constant 0.000000e+00 : f32
    %43 = vector.broadcast %cst_20 : f32 to vector<8x1xf32>
    %44 = arith.subf %43, %42 : vector<8x1xf32>
    %cst_21 = arith.constant 0.000000e+00 : f32
    %45 = vector.broadcast %cst_21 : f32 to vector<8x1xf32>
    %46 = arith.maximumf %44, %45 : vector<8x1xf32>
    %47 = math.absf %42 : vector<8x1xf32>
    %cst_22 = arith.constant 0.000000e+00 : f32
    %48 = vector.broadcast %cst_22 : f32 to vector<8x1xf32>
    %49 = arith.subf %48, %47 : vector<8x1xf32>
    %50 = math.exp %49 : vector<8x1xf32>
    %51 = math.log1p %50 : vector<8x1xf32>
    %52 = arith.addf %46, %51 : vector<8x1xf32>
    %c0_23 = arith.constant 0 : index
    %c0_24 = arith.constant 0 : index
    %53 = vector.load %arg7[%c0_23, %c0_24] : memref<8x1xf32, #tpu.memory_space<vmem>>, vector<8x1xf32>
    tpu.vector_store %arg7[%c0_23, %c0_24], %52 {strides = array<i32>} : memref<8x1xf32, #tpu.memory_space<vmem>>, vector<8x1xf32>,
    %54 = arith.cmpf ogt, %41, %38 : vector<8x1xf32>
    %55 = arith.extui %54 : vector<8x1xi1> to vector<8x1xi32>
    %56 = arith.sitofp %55 : vector<8x1xi32> to vector<8x1xf32>
    %c0_25 = arith.constant 0 : index
    %c0_26 = arith.constant 0 : index
    %57 = vector.load %arg8[%c0_25, %c0_26] : memref<8x1xf32, #tpu.memory_space<vmem>>, vector<8x1xf32>
    tpu.vector_store %arg8[%c0_25, %c0_26], %56 {strides = array<i32>} : memref<8x1xf32, #tpu.memory_space<vmem>>, vector<8x1xf32>,
    return
  }
  func.func @transform_0(%arg0: i32, %arg1: memref<1xi32, #tpu.memory_space<smem>>) -> (i32, i32) {
    %c0_i32 = arith.constant 0 : i32
    %c0_i32_0 = arith.constant 0 : i32
    return %arg0, %c0_i32 : i32, i32
  }
  func.func @transform_1(%arg0: i32, %arg1: memref<1xi32, #tpu.memory_space<smem>>) -> (i32, i32) {
    %c0_i32 = arith.constant 0 : i32
    %c0_i32_0 = arith.constant 0 : i32
    %c0_i32_1 = arith.constant 0 : i32
    return %c0_i32, %c0_i32_0 : i32, i32
  }
  func.func @transform_2(%arg0: i32, %arg1: memref<1xi32, #tpu.memory_space<smem>>) -> (i32, i32) {
    %c0_i32 = arith.constant 0 : i32
    %c0_i32_0 = arith.constant 0 : i32
    %c0_i32_1 = arith.constant 0 : i32
    return %c0_i32, %c0_i32_0 : i32, i32
  }
  func.func @transform_3(%arg0: i32, %arg1: memref<1xi32, #tpu.memory_space<smem>>) -> (i32, i32) {
    %c0_i32 = arith.constant 0 : i32
    %c0_i32_0 = arith.constant 0 : i32
    return %arg0, %c0_i32 : i32, i32
  }
  func.func @transform_4(%arg0: i32, %arg1: memref<1xi32, #tpu.memory_space<smem>>) -> (i32, i32) {
    %c0_i32 = arith.constant 0 : i32
    %c0_i32_0 = arith.constant 0 : i32
    %c0_i32_1 = arith.constant 0 : i32
    return %c0_i32, %c0_i32_0 : i32, i32
  }
  func.func @transform_5(%arg0: i32, %arg1: memref<1xi32, #tpu.memory_space<smem>>) -> (i32, i32) {
    %c0_i32 = arith.constant 0 : i32
    %c0_i32_0 = arith.constant 0 : i32
    return %arg0, %c0_i32 : i32, i32
  }
  func.func @transform_6(%arg0: i32, %arg1: memref<1xi32, #tpu.memory_space<smem>>) -> (i32, i32) {
    %c0_i32 = arith.constant 0 : i32
    %c0_i32_0 = arith.constant 0 : i32
    return %arg0, %c0_i32 : i32, i32
  }
}

</mosaic_0001>

<llo_original>
// kernel: tpu_custom_call.1
$region0: #{tpu_custom_call.1}
  #allocation0 [shape = 'u32[]', space=smem, size = 0x4, offset = 0x4, fixed_abs, tag = 'smem constant byte address 0x4 - core index']
  #allocation1 [shape = 'u32[144,128]{1,0:T(1,128)}', space=vmem, size = 0x12000, scoped, tag = 'internal scratch']
  #allocation2 [shape = 's32[1]{0}', space=sflag, size = 0x4, scoped, tag = 'scoped memory for tpu_custom_call.1']
  #allocation3 [shape = 's32[1]{0:T(128)S(6)}', space=smem, size = 0x200, scoped, tag = 'prefetched SMEM operand 0']
  %s0 = inlined_call_operand.<no memory space> [shape: s32[1], index: 0, kind: input, shape index: {}]
  %s1 = inlined_call_operand.vmem [shape: f32[8,128], index: 1, kind: input, shape index: {}]
  %s2 = inlined_call_operand.vmem [shape: f32[8,128], index: 2, kind: input, shape index: {}]
  %s3 = inlined_call_operand.vmem [shape: f32[1,8], index: 3, kind: input, shape index: {}]
  %s4 = inlined_call_operand.vmem [shape: s32[8,1], index: 4, kind: input, shape index: {}]
  %s5 = inlined_call_operand.vmem [shape: s32[1,8], index: 5, kind: input, shape index: {}]
  %s6 = inlined_call_operand.vmem [shape: f32[8,1], index: 6, kind: output, shape index: {0}]
  %s7 = inlined_call_operand.vmem [shape: f32[8,1], index: 7, kind: output, shape index: {1}]
  %8 = xla_tuple %s6, %s7
  %s9 = sld [smem:[#allocation0]]
  $region38: #{tpu_custom_call.1} parent=0
    _
  %s11 = ssub.s32 1, %s9
  %s12 = scalar_select 0, %s11, %s9
  %13 = sst [smem:[#allocation3]] %s0
  // Predicated region
  $region2: #{tpu_custom_call.1} parent=0 // pred_check
    _
  $region3: #{tpu_custom_call.1} parent=0 // pred_check_branch
    %15 = sbr.rel (0) target = $region5
  $region4: #{tpu_custom_call.1} parent=0 // pred_region
    _
  $region5: #{tpu_custom_call.1} parent=0 // pred_fallthru
    _
  // Predicated region
  $region6: #{tpu_custom_call.1} parent=0 // pred_check
    _
  $region7: #{tpu_custom_call.1} parent=0 // pred_check_branch
    %17 = sbr.rel (0) target = $region9
  $region8: #{tpu_custom_call.1} parent=0 // pred_region
    _
  $region9: #{tpu_custom_call.1} parent=0 // pred_fallthru
    _
  // Predicated region
  $region10: #{tpu_custom_call.1} parent=0 // pred_check
    _
  $region11: #{tpu_custom_call.1} parent=0 // pred_check_branch
    %19 = sbr.rel (0) target = $region13
  $region12: #{tpu_custom_call.1} parent=0 // pred_region
    _
  $region13: #{tpu_custom_call.1} parent=0 // pred_fallthru
    _
  // Predicated region
  $region14: #{tpu_custom_call.1} parent=0 // pred_check
    _
  $region15: #{tpu_custom_call.1} parent=0 // pred_check_branch
    %21 = sbr.rel (0) target = $region17
  $region16: #{tpu_custom_call.1} parent=0 // pred_region
    _
  $region17: #{tpu_custom_call.1} parent=0 // pred_fallthru
    _
  // Predicated region
  $region18: #{tpu_custom_call.1} parent=0 // pred_check
    _
  $region19: #{tpu_custom_call.1} parent=0 // pred_check_branch
    %23 = sbr.rel (0) target = $region21
  $region20: #{tpu_custom_call.1} parent=0 // pred_region
    _
  $region21: #{tpu_custom_call.1} parent=0 // pred_fallthru
    _
  %v24 = vld [vmem:[%s1] sm:$0xff]
  %v25 = vld [vmem:[%s2] sm:$0xff]
  %v26 = vld [vmem:[%s3] sm:$0x1]
  %v27 = vld [vmem:[%s4] sm:$0xff]
  %v28 = vld [vmem:[%s5] sm:$0x1]
  %s29 = sld [smem:[#allocation3]]
  %v30 = vmul.f32 %v24, %v24
  %31 = vadd.xlane.f32.xlu0 %v30
  %v32 = vpop.xlane.xlu0 %31
  %33 = vmatprep.subr.mxu0 0.0
  %34 = vmatpush1.xpose.msra.mxu0 %v25
  %35 = vmatprep.subr.mxu0 0.0
  %36 = vmatpush1.xpose.msra.mxu0 0.0
  %37 = vmatprep.subr.mxu0 0.0
  %38 = vmatpush1.xpose.msra.mxu0 0.0
  %39 = vmatprep.subr.mxu0 0.0
  %40 = vmatpush1.xpose.msra.mxu0 0.0
  %41 = vmatprep.subr.mxu0 0.0
  %42 = vmatpush1.xpose.msra.mxu0 0.0
  %43 = vmatprep.subr.mxu0 0.0
  %44 = vmatpush1.xpose.msra.mxu0 0.0
  %45 = vmatprep.subr.mxu0 0.0
  %46 = vmatpush1.xpose.msra.mxu0 0.0
  %47 = vmatprep.subr.mxu0 0.0
  %48 = vmatpush1.xpose.msra.mxu0 0.0
  %49 = vmatprep.subr.mxu0 0.0
  %50 = vmatpush1.xpose.msra.mxu0 0.0
  %51 = vmatprep.subr.mxu0 0.0
  %52 = vmatpush1.xpose.msra.mxu0 0.0
  %53 = vmatprep.subr.mxu0 0.0
  %54 = vmatpush1.xpose.msra.mxu0 0.0
  %55 = vmatprep.subr.mxu0 0.0
  %56 = vmatpush1.xpose.msra.mxu0 0.0
  %57 = vmatprep.subr.mxu0 0.0
  %58 = vmatpush1.xpose.msra.mxu0 0.0
  %59 = vmatprep.subr.mxu0 0.0
  %60 = vmatpush1.xpose.msra.mxu0 0.0
  %61 = vmatprep.subr.mxu0 0.0
  %62 = vmatpush1.xpose.msra.mxu0 0.0
  %63 = vmatprep.subr.mxu0 0.0
  %64 = vmatpush1.xpose.msra.mxu0 0.0
  %65 = vmatprep.subr.mxu0 0.0
  %66 = vmatpush1.xpose.msra.mxu0 0.0
  %67 = vmatprep.subr.mxu0 0.0
  %68 = vmatpush1.xpose.msra.mxu0 0.0
  %69 = vmatprep.subr.mxu0 0.0
  %70 = vmatpush1.xpose.msra.mxu0 0.0
  %71 = vmatprep.subr.mxu0 0.0
  %72 = vmatpush1.xpose.msra.mxu0 0.0
  %73 = vmatprep.subr.mxu0 0.0
  %74 = vmatpush1.xpose.msra.mxu0 0.0
  %75 = vmatprep.subr.mxu0 0.0
  %76 = vmatpush1.xpose.msra.mxu0 0.0
  %77 = vmatprep.subr.mxu0 0.0
  %78 = vmatpush1.xpose.msra.mxu0 0.0
  %79 = vmatprep.subr.mxu0 0.0
  %80 = vmatpush1.xpose.msra.mxu0 0.0
  %81 = vmatprep.subr.mxu0 0.0
  %82 = vmatpush1.xpose.msra.mxu0 0.0
  %83 = vmatprep.subr.mxu0 0.0
  %84 = vmatpush1.xpose.msra.mxu0 0.0
  %85 = vmatprep.subr.mxu0 0.0
  %86 = vmatpush1.xpose.msra.mxu0 0.0
  %87 = vmatprep.subr.mxu0 0.0
  %88 = vmatpush1.xpose.msra.mxu0 0.0
  %89 = vmatprep.subr.mxu0 0.0
  %90 = vmatpush1.xpose.msra.mxu0 0.0
  %91 = vmatprep.subr.mxu0 0.0
  %92 = vmatpush1.xpose.msra.mxu0 0.0
  %93 = vmatprep.subr.mxu0 0.0
  %94 = vmatpush1.xpose.msra.mxu0 0.0
  %95 = vmatprep.subr.mxu0 0.0
  %96 = vmatpush1.xpose.msra.mxu0 0.0
  %97 = vmatprep.mubr.f32.mxu0 0.0
  %98 = vmatmul.mubr.f32.gmra.mrb[0].mxu0 %v24
  %v99 = vpop.f32.mrb[0].mxu0
  %v100 = vadd.f32 0.0, %v99
  %v101 = vpop.f32.mrb[0].mxu0
  %102 = vdwg.mxu0
  %v104 = vlaneseq
  %v105 = vshrl.u32 %v104, 7
  %v106 = vsub.s32 0, %v105
  %v107 = vrot.slane %v26, %v106
  %v109 = vadd.f32 %v32, %v107
  %v110 = vmul.f32 %v100, 2.0
  %v111 = vsub.f32 %v109, %v110
  %v112 = vlaneseq
  %v113 = vand.u32 %v112, 127
  %v114 = vstv %s29
  %vm115 = vcmp.lt.s32.totalorder %v113, %v114
  %116 = vset.pattern.permute.xlu0 0
  %117 = vperm.xlu0 %116, %v27
  %v118 = vpop.permute.xlu0 %117
  %v119 = vlaneseq
  %v120 = vshrl.u32 %v119, 7
  %v121 = vsub.s32 0, %v120
  %v122 = vrot.slane %v28, %v121
  %vm123 = vcmp.eq.s32.totalorder %v118, %v122
  %v124 = vsel %vm115, 1, 0
  %vm125 = vcmp.eq.s32.totalorder %v124, 1
  %vm126 = vmand %vm123, %vm125
  %v127 = vsel %vm126, %v111, -1e+30
  %vm128 = vmxor %vm115, 1
  %v129 = vsel %vm128, 1, 0
  %vm130 = vcmp.eq.s32.totalorder %v129, 1
  %vm131 = vmor %vm123, %vm130
  %v132 = vsel %vm131, 1e+30, %v111
  %vm133 = vcmask 64512
  %v134 = vsel %vm133, %v127, -inf
  %135 = vmax.xlane.f32.xlu0 %v134
  %v136 = vpop.xlane.xlu0 %135
  %v137 = vsel %vm133, %v132, inf
  %138 = vmin.xlane.f32.xlu0 %v137
  %v139 = vpop.xlane.xlu0 %138
  %v140 = vmax.f32 %v136, 1e-12
  %v141 = vrsqrt.pop %v140
  %v142 = vmul.f32 %v140, %v141
  %vm143 = vcmp.eq.f32.partialorder %v140, inf
  %v144 = vsel %vm143, %v140, %v142
  %vm145 = vcmp.eq.f32.partialorder %v140, 0.0
  %v146 = vand.u32 %v140, 2147483648
  %v147 = vsel %vm145, %v146, %v144
  %v148 = vmax.f32 %v139, 1e-12
  %v149 = vrsqrt.pop %v148
  %v150 = vmul.f32 %v148, %v149
  %vm151 = vcmp.eq.f32.partialorder %v148, inf
  %v152 = vsel %vm151, %v148, %v150
  %vm153 = vcmp.eq.f32.partialorder %v148, 0.0
  %v154 = vand.u32 %v148, 2147483648
  %v155 = vsel %vm153, %v154, %v152
  %v156 = vsub.f32 %v155, %v147
  %v157 = vsub.f32 0.0, %v156
  %v158 = vmax.f32 %v157, 0.0
  %v159 = vand.u32 2147483647, %v156
  %v160 = vsub.f32 0.0, %v159
  %v161 = vmul.f32 %v160, 1.442695
  %v162 = vpow.pop %v161
  %v163 = vadd.f32 %v162, 1.0
  %v164 = vlog2.pop %v163
  %v165 = vmul.f32 %v164, 0.6931472
  %v166 = vmul.f32 -0.5, %v162
  %v167 = vadd.f32 %v166, 1.0
  %v168 = vmul.f32 %v167, %v162
  %v169 = vand.u32 2147483647, %v162
  %vm170 = vcmp.lt.f32.partialorder %v169, 0.0004427343
  %v171 = vsel %vm170, %v168, %v165
  %v172 = vadd.f32 %v158, %v171
  %vm173 = vcmask 7168
  %174 = vst.msk [vmem:[%s6] sm:$0xff] %vm173, %v172
  %vm175 = vcmp.gt.f32.partialorder %v155, %v147
  %v176 = vsel %vm175, 1, 0
  %v177 = vcvt.s32.f32 %v176
  %178 = vst.msk [vmem:[%s7] sm:$0xff] %vm173, %v177
  // Predicated region
  $region22: #{tpu_custom_call.1} parent=0 // pred_check
    _
  $region23: #{tpu_custom_call.1} parent=0 // pred_check_branch
    %180 = sbr.rel (0) target = $region25
  $region24: #{tpu_custom_call.1} parent=0 // pred_region
    _
  $region25: #{tpu_custom_call.1} parent=0 // pred_fallthru
    _
  // Predicated region
  $region26: #{tpu_custom_call.1} parent=0 // pred_check
    _
  $region27: #{tpu_custom_call.1} parent=0 // pred_check_branch
    %182 = sbr.rel (0) target = $region29
  $region28: #{tpu_custom_call.1} parent=0 // pred_region
    _
  $region29: #{tpu_custom_call.1} parent=0 // pred_fallthru
    _
  // Predicated region
  $region30: #{tpu_custom_call.1} parent=0 // pred_check
    _
  $region31: #{tpu_custom_call.1} parent=0 // pred_check_branch
    %184 = sbr.rel (0) target = $region33
  $region32: #{tpu_custom_call.1} parent=0 // pred_region
    _
  $region33: #{tpu_custom_call.1} parent=0 // pred_fallthru
    _
  // Predicated region
  $region34: #{tpu_custom_call.1} parent=0 // pred_check
    _
  $region35: #{tpu_custom_call.1} parent=0 // pred_check_branch
    %186 = sbr.rel (0) target = $region37
  $region36: #{tpu_custom_call.1} parent=0 // pred_region
    _
  $region37: #{tpu_custom_call.1} parent=0 // pred_fallthru
    _

</llo_original>
